<compile_context>
chip_gen: v5e
topology: v5e:2x2
jax: 0.10.0
libtpu: 0.0.40
codegen_flags: <defaults>
</compile_context>

<pallas_src>
import jax
import jax.numpy as jnp
from jax.experimental import pallas as pl
from jax.experimental.pallas import tpu as pltpu


# ------------------------------ kernels ------------------------------------


def _silu_gate(h, g):
    # silu(h) * g with the divide on the EUP (reciprocal slot), exp on EUP too.
    sig = pl.reciprocal(1.0 + jnp.exp(-h), approx=True)
    return (h * sig) * g


def _swiglu_resident_kernel(x_ref, wf_ref, wo_ref, o_ref):
    # Weights fully resident in VMEM (single k block): one wide MXU pass for
    # both projections, elementwise gate, second MXU pass, no accumulator.
    tk = wf_ref.shape[1] // 2
    hg = jnp.dot(x_ref[...], wf_ref[...], preferred_element_type=jnp.float32)
    interm = _silu_gate(hg[:, :tk], hg[:, tk:])
    o_ref[...] = jnp.dot(interm.astype(wo_ref.dtype), wo_ref[...],
                         preferred_element_type=jnp.float32).astype(o_ref.dtype)


def _swiglu_streamed_f32_kernel(x_ref, wf_ref, wo_ref, o_ref):
    # Streamed interm chunks, f32 output: accumulate straight into the
    # (k-resident) output block -- no scratch accumulator needed.
    k = pl.program_id(1)
    tk = wf_ref.shape[1] // 2
    hg = jnp.dot(x_ref[...], wf_ref[...], preferred_element_type=jnp.float32)
    interm = _silu_gate(hg[:, :tk], hg[:, tk:])
    contrib = jnp.dot(interm.astype(wo_ref.dtype), wo_ref[...],
                      preferred_element_type=jnp.float32)

    @pl.when(k == 0)
    def _():
        o_ref[...] = contrib

    @pl.when(k > 0)
    def _():
        o_ref[...] += contrib


def _swiglu_streamed_acc_kernel(x_ref, wf_ref, wo_ref, o_ref, acc_ref):
    # Streamed interm chunks, low-precision output: f32 VMEM accumulator.
    k = pl.program_id(1)
    tk = wf_ref.shape[1] // 2
    hg = jnp.dot(x_ref[...], wf_ref[...], preferred_element_type=jnp.float32)
    interm = _silu_gate(hg[:, :tk], hg[:, tk:])
    contrib = jnp.dot(interm.astype(wo_ref.dtype), wo_ref[...],
                      preferred_element_type=jnp.float32)

    @pl.when(k == 0)
    def _():
        acc_ref[...] = contrib

    @pl.when(k > 0)
    def _():
        acc_ref[...] += contrib

    @pl.when(k == pl.num_programs(1) - 1)
    def _():
        o_ref[...] = acc_ref[...].astype(o_ref.dtype)


# ------------------------------ helpers ------------------------------------


def _round_up(n, m):
    return ((n + m - 1) // m) * m


def _vmem_budget_bytes():
    """Generation-aware VMEM budget: ~0.8x physical (leaves Mosaic headroom)."""
    cap = None
    try:
        info = pltpu.get_tpu_info()
        cap = int(getattr(info, "vmem_capacity_bytes", 0)) or None
    except Exception:
        cap = None
    if cap is None:
        cap = 64 << 20  # conservative: assume v7x-sized (64 MiB) VMEM
    return int(cap * 0.8)  # ~51 MiB on v7x, ~102 MiB on v5e/v6e


def _default_tm(M, vmem_budget):
    # 512 reaches the MXU roofline on v6e/v7x; only go to 1024 where the big
    # (v5e/v6e 128 MiB) VMEM makes it cheap and M is large. (On v5e, pass
    # tm=384/512 explicitly if 1024 measures worse.)
    if vmem_budget >= (96 << 20) and M >= 4096:
        return 1024
    return 512


def _vmem_need_bytes(tm, tk, input_dim, output_dim, x_isz, w_isz, out_isz, use_acc):
    """Working-set estimate incl. double buffers AND in-kernel temporaries."""
    need = (2 * tm * input_dim * x_isz            # x tiles (double-buffered)
            + 2 * input_dim * 2 * tk * w_isz      # fused [w_in | v] tiles
            + 2 * tk * output_dim * w_isz         # w_out tiles
            + 2 * tm * output_dim * out_isz)      # output tiles
    if use_acc:
        need += tm * output_dim * 4               # f32 accumulator scratch
    # temporaries: hg (f32), sigmoid (f32), interm (f32), low-precision cast
    need += tm * 2 * tk * 4 + 2 * tm * tk * 4 + tm * tk * w_isz
    return need


# ------------------------------ wrapper ------------------------------------


def swiglu_pallas(x, w_fused, w_out_t, *, tk, tm=None, vmem_budget=None):
    """x: (M, input_dim); w_fused: (input_dim, 2*interm_pad) interleaved per tk
    tile; w_out_t: (interm_pad, output_dim). Returns (M, output_dim)."""
    M, input_dim = x.shape
    interm_pad, output_dim = w_out_t.shape
    assert w_fused.shape == (input_dim, 2 * interm_pad)
    assert interm_pad % tk == 0
    n_k = interm_pad // tk

    if vmem_budget is None:
        vmem_budget = _vmem_budget_bytes()

    x_isz = jnp.dtype(x.dtype).itemsize
    w_isz = jnp.dtype(w_fused.dtype).itemsize
    out_dtype = x.dtype
    out_isz = jnp.dtype(out_dtype).itemsize
    f32_out = out_dtype == jnp.float32
    use_acc = (n_k > 1) and (not f32_out)

    # ---- row tile selection ----
    if tm is None:
        tm = _default_tm(M, vmem_budget)
    tm = _round_up(max(8, tm), 8)
    tm = min(tm, _round_up(M, 8))
    # Megacore (v7x): make sure the "parallel" row axis has >= 2 tiles.
    while tm > 128 and _round_up(M, tm) // tm < 2:
        tm = max(8, _round_up(tm // 2, 8))
    # Shrink tm until the working set fits the generation-aware VMEM budget.
    while tm > 128 and _vmem_need_bytes(tm, tk, input_dim, output_dim,
                                        x_isz, w_isz, out_isz,
                                        use_acc) > int(0.9 * vmem_budget):
        tm = max(8, _round_up(tm // 2, 8))

    m_pad = _round_up(M, tm)
    if m_pad != M:
        x = jnp.pad(x, ((0, m_pad - M), (0, 0)))
    rows = m_pad // tm

    vmem_need = _vmem_need_bytes(tm, tk, input_dim, output_dim,
                                 x_isz, w_isz, out_isz, use_acc)
    vmem_limit = int(min(max(vmem_need + (4 << 20), 32 << 20), vmem_budget))

    weight_bytes = (w_fused.size + w_out_t.size) * w_isz
    cost = pl.CostEstimate(
        flops=int(2 * m_pad * input_dim * 2 * interm_pad
                  + 2 * m_pad * interm_pad * output_dim
                  + 6 * m_pad * interm_pad),
        transcendentals=int(m_pad * interm_pad),
        bytes_accessed=int(m_pad * input_dim * x_isz
                           + (1 if n_k == 1 else rows) * weight_bytes
                           + m_pad * output_dim * out_isz),
    )

    if n_k == 1:
        # Weights-resident fast path: weights DMA'd once per call (constant
        # index map), no k axis, no accumulator.
        kernel = _swiglu_resident_kernel
        grid_spec = pltpu.PrefetchScalarGridSpec(
            num_scalar_prefetch=0,
            grid=(rows,),
            in_specs=[
                pl.BlockSpec((tm, input_dim), lambda i: (i, 0)),
                pl.BlockSpec((input_dim, 2 * tk), lambda i: (0, 0)),
                pl.BlockSpec((tk, output_dim), lambda i: (0, 0)),
            ],
            out_specs=pl.BlockSpec((tm, output_dim), lambda i: (i, 0)),
        )
        dims = ("parallel",)
    else:
        in_specs = [
            pl.BlockSpec((tm, input_dim), lambda i, k: (i, 0)),
            pl.BlockSpec((input_dim, 2 * tk), lambda i, k: (0, k)),
            pl.BlockSpec((tk, output_dim), lambda i, k: (k, 0)),
        ]
        out_specs = pl.BlockSpec((tm, output_dim), lambda i, k: (i, 0))
        if f32_out:
            kernel = _swiglu_streamed_f32_kernel
            scratch = []
        else:
            kernel = _swiglu_streamed_acc_kernel
            scratch = [pltpu.VMEM((tm, output_dim), jnp.float32)]
        grid_spec = pltpu.PrefetchScalarGridSpec(
            num_scalar_prefetch=0,
            grid=(rows, n_k),
            in_specs=in_specs,
            out_specs=out_specs,
            scratch_shapes=scratch,
        )
        dims = ("parallel", "arbitrary")

    out = pl.pallas_call(
        kernel,
        out_shape=jax.ShapeDtypeStruct((m_pad, output_dim), out_dtype),
        grid_spec=grid_spec,
        compiler_params=pltpu.CompilerParams(
            dimension_semantics=dims, vmem_limit_bytes=vmem_limit),
        cost_estimate=cost,
    )(x, w_fused, w_out_t)

    return out[:M] if m_pad != M else out


def make_swiglu(w_in, v, w_out, *, tm=None, tk=None, vmem_budget=None):
    """One-time weight prep (transpose + zero-pad + fuse) from PyTorch Linear
    layout: w_in, v: (interm_dim, input_dim); w_out: (output_dim, interm_dim).
    Returns apply(x) -> (..., output_dim)."""
    interm_dim, input_dim = w_in.shape
    output_dim, interm_dim2 = w_out.shape
    assert v.shape == (interm_dim, input_dim)
    assert interm_dim2 == interm_dim

    if vmem_budget is None:
        vmem_budget = _vmem_budget_bytes()
    w_isz = jnp.dtype(w_in.dtype).itemsize

    if tk is None:
        interm_res = _round_up(interm_dim, 128)
        # Weights-resident fast path if all fused weights + a tm=256 row tile
        # fit the per-generation VMEM budget.
        resident_need = _vmem_need_bytes(256, interm_res, input_dim, output_dim,
                                         w_isz, w_isz, w_isz, False)
        if resident_need <= int(0.85 * vmem_budget):
            tk = interm_res
        else:
            tk = min(512, interm_res)
            while tk > 128 and _vmem_need_bytes(256, tk, input_dim, output_dim,
                                                w_isz, w_isz, w_isz,
                                                True) > int(0.85 * vmem_budget):
                tk //= 2
            tk = max(128, tk)
    assert tk % 8 == 0
    interm_pad = _round_up(interm_dim, tk)
    # Lane constraint on the fused-weight block: width 2*tk must be a multiple
    # of 128 unless it covers the full padded interm dim.
    assert (2 * tk) % 128 == 0 or tk == interm_pad
    n_k = interm_pad // tk

    w_in_t = jnp.asarray(w_in).T      # (input_dim, interm_dim)
    v_t = jnp.asarray(v).T            # (input_dim, interm_dim)
    w_out_t = jnp.asarray(w_out).T    # (interm_dim, output_dim)
    if interm_pad != interm_dim:
        # Zero-padding the interm (reduction) dim is numerically exact.
        pad = interm_pad - interm_dim
        w_in_t = jnp.pad(w_in_t, ((0, 0), (0, pad)))
        v_t = jnp.pad(v_t, ((0, 0), (0, pad)))
        w_out_t = jnp.pad(w_out_t, ((0, pad), (0, 0)))

    # Interleave per tk tile: block k (width 2*tk) = [w_in tile k | v tile k].
    w_fused = jnp.concatenate(
        [w_in_t.reshape(input_dim, n_k, 1, tk),
         v_t.reshape(input_dim, n_k, 1, tk)], axis=2,
    ).reshape(input_dim, 2 * interm_pad)
    w_fused = jax.block_until_ready(w_fused)
    w_out_t = jax.block_until_ready(w_out_t)

    def apply(x):
        lead = x.shape[:-1]
        x2d = x.reshape(-1, x.shape[-1])
        out2d = swiglu_pallas(x2d, w_fused, w_out_t, tk=tk, tm=tm,
                              vmem_budget=vmem_budget)
        return out2d.reshape(*lead, output_dim)

    return apply


def swiglu_ref(x, w_in, v, w_out):
    h = x @ w_in.T
    g = x @ v.T
    return (jax.nn.silu(h) * g) @ w_out.T


# ------------------------------ self-test -----------------------------------


if __name__ == "__main__":
    key = jax.random.PRNGKey(0)

    # ---- Test 1: module-sized shapes (f32) -> weights-resident fast path ----
    batch, seq = 2, 8
    input_dim, interm_dim, output_dim = 32, 64, 32
    kx, k1, k2, k3, key = jax.random.split(key, 5)
    x = jax.random.normal(kx, (batch, seq, input_dim), dtype=jnp.float32)
    # PyTorch Linear layout: (out_features, in_features)
    w_in = jax.random.normal(k1, (interm_dim, input_dim), dtype=jnp.float32) * 0.05
    v = jax.random.normal(k2, (interm_dim, input_dim), dtype=jnp.float32) * 0.05
    w_out = jax.random.normal(k3, (output_dim, interm_dim), dtype=jnp.float32) * 0.05

    swiglu = make_swiglu(w_in, v, w_out)   # weight prep once, outside hot path
    out = swiglu(x)
    jax.block_until_ready(out)
    ref = swiglu_ref(x, w_in, v, w_out)
    assert out.shape == ref.shape
    assert jnp.allclose(out, ref, atol=1e-3, rtol=1e-3), "resident path mismatch"

    # ---- Test 2: streamed-k path (f32, in-place accumulation), odd M -------
    M2, in2, im2, od2 = 37, 32, 256, 32
    kx, k1, k2, k3, key = jax.random.split(key, 5)
    x2 = jax.random.normal(kx, (M2, in2), dtype=jnp.float32)
    w_in2 = jax.random.normal(k1, (im2, in2), dtype=jnp.float32) * 0.05
    v2 = jax.random.normal(k2, (im2, in2), dtype=jnp.float32) * 0.05
    w_out2 = jax.random.normal(k3, (od2, im2), dtype=jnp.float32) * 0.05
    swiglu2 = make_swiglu(w_in2, v2, w_out2, tk=128)   # force n_k = 2 (streamed)
    o2 = swiglu2(x2)
    jax.block_until_ready(o2)
    r2 = swiglu_ref(x2, w_in2, v2, w_out2)
    assert o2.shape == r2.shape
    assert jnp.allclose(o2, r2, atol=1e-3, rtol=1e-3), "streamed f32 path mismatch"

    # ---- Test 3: streamed-k path, bf16 data (f32 scratch accumulator) ------
    xb = x2.astype(jnp.bfloat16)
    wb_in, vb, wb_out = (w_in2.astype(jnp.bfloat16), v2.astype(jnp.bfloat16),
                         w_out2.astype(jnp.bfloat16))
    swiglu3 = make_swiglu(wb_in, vb, wb_out, tk=128)
    o3 = swiglu3(xb)
    jax.block_until_ready(o3)
    r3 = swiglu_ref(xb.astype(jnp.float32), wb_in.astype(jnp.float32),
                    vb.astype(jnp.float32), wb_out.astype(jnp.float32))
    assert o3.shape == r3.shape
    assert jnp.allclose(o3.astype(jnp.float32), r3, atol=3e-2, rtol=3e-2), \
        "bf16 streamed path mismatch"

    print("KERNEL_OK")
</pallas_src>

<mosaic_0001>
module attributes {stable_mosaic.version = 11 : i64} {
  func.func @_swiglu_resident_kernel(%arg0: i32, %arg1: memref<16x32xf32, #tpu.memory_space<vmem>>, %arg2: memref<32x256xf32, #tpu.memory_space<vmem>>, %arg3: memref<128x32xf32, #tpu.memory_space<vmem>>, %arg4: memref<16x32xf32, #tpu.memory_space<vmem>>) attributes {dimension_semantics = [#tpu.dimension_semantics<parallel>], iteration_bounds = array<i64: 1>, scalar_prefetch = 0 : i64, scratch_operands = 0 : i64, tpu.core_type = #tpu.core_type<tc>, window_params = [{transform_indices = @transform_0, window_bounds = array<i64: 16, 32>}, {pipeline_mode = #tpu.pipeline_mode<synchronous>, transform_indices = @transform_1, window_bounds = array<i64: 32, 256>}, {pipeline_mode = #tpu.pipeline_mode<synchronous>, transform_indices = @transform_2, window_bounds = array<i64: 128, 32>}, {transform_indices = @transform_3, window_bounds = array<i64: 16, 32>}]} {
    %c0 = arith.constant 0 : index
    %c0_0 = arith.constant 0 : index
    %0 = vector.load %arg1[%c0, %c0_0] : memref<16x32xf32, #tpu.memory_space<vmem>>, vector<16x32xf32>
    %c0_1 = arith.constant 0 : index
    %c0_2 = arith.constant 0 : index
    %1 = vector.load %arg2[%c0_1, %c0_2] : memref<32x256xf32, #tpu.memory_space<vmem>>, vector<32x256xf32>
    %cst = arith.constant dense<0.000000e+00> : vector<16x256xf32>
    %2 = tpu.matmul %0, %1, %cst {dimension_numbers = #tpu.dot_dimension_numbers<[1], [0], [0], [1], [0, 0, 1, 1], [], []>} : vector<16x32xf32>, vector<32x256xf32>, vector<16x256xf32> -> vector<16x256xf32>
    %3 = vector.extract_strided_slice %2 {offsets = [0, 0], sizes = [16, 128], strides = [1, 1]} : vector<16x256xf32> to vector<16x128xf32>
    %4 = vector.extract_strided_slice %2 {offsets = [0, 128], sizes = [16, 128], strides = [1, 1]} : vector<16x256xf32> to vector<16x128xf32>
    %cst_3 = arith.constant 0.000000e+00 : f32
    %5 = vector.broadcast %cst_3 : f32 to vector<16x128xf32>
    %6 = arith.subf %5, %3 : vector<16x128xf32>
    %7 = math.exp %6 : vector<16x128xf32>
    %cst_4 = arith.constant 1.000000e+00 : f32
    %8 = vector.broadcast %cst_4 : f32 to vector<16x128xf32>
    %9 = arith.addf %8, %7 : vector<16x128xf32>
    %10 = tpu.reciprocal %9 {approx = true} : vector<16x128xf32> -> vector<16x128xf32>
    %11 = arith.mulf %3, %10 : vector<16x128xf32>
    %12 = arith.mulf %11, %4 : vector<16x128xf32>
    %c0_5 = arith.constant 0 : index
    %c0_6 = arith.constant 0 : index
    %13 = vector.load %arg3[%c0_5, %c0_6] : memref<128x32xf32, #tpu.memory_space<vmem>>, vector<128x32xf32>
    %cst_7 = arith.constant dense<0.000000e+00> : vector<16x32xf32>
    %14 = tpu.matmul %12, %13, %cst_7 {dimension_numbers = #tpu.dot_dimension_numbers<[1], [0], [0], [1], [0, 0, 1, 1], [], []>} : vector<16x128xf32>, vector<128x32xf32>, vector<16x32xf32> -> vector<16x32xf32>
    %c0_8 = arith.constant 0 : index
    %c0_9 = arith.constant 0 : index
    %15 = vector.load %arg4[%c0_8, %c0_9] : memref<16x32xf32, #tpu.memory_space<vmem>>, vector<16x32xf32>
    tpu.vector_store %arg4[%c0_8, %c0_9], %14 {strides = array<i32>} : memref<16x32xf32, #tpu.memory_space<vmem>>, vector<16x32xf32>,
    return
  }
  func.func @transform_0(%arg0: i32) -> (i32, i32) {
    %c0_i32 = arith.constant 0 : i32
    %c0_i32_0 = arith.constant 0 : i32
    return %arg0, %c0_i32 : i32, i32
  }
  func.func @transform_1(%arg0: i32) -> (i32, i32) {
    %c0_i32 = arith.constant 0 : i32
    %c0_i32_0 = arith.constant 0 : i32
    %c0_i32_1 = arith.constant 0 : i32
    return %c0_i32, %c0_i32_0 : i32, i32
  }
  func.func @transform_2(%arg0: i32) -> (i32, i32) {
    %c0_i32 = arith.constant 0 : i32
    %c0_i32_0 = arith.constant 0 : i32
    %c0_i32_1 = arith.constant 0 : i32
    return %c0_i32, %c0_i32_0 : i32, i32
  }
  func.func @transform_3(%arg0: i32) -> (i32, i32) {
    %c0_i32 = arith.constant 0 : i32
    %c0_i32_0 = arith.constant 0 : i32
    return %arg0, %c0_i32 : i32, i32
  }
}

</mosaic_0001>

<llo_original>
// kernel: tpu_custom_call.1
$region0: #{tpu_custom_call.1}
  #allocation0 [shape = 'u32[]', space=smem, size = 0x4, offset = 0x4, fixed_abs, tag = 'smem constant byte address 0x4 - core index']
  #allocation1 [shape = 'u32[72,128]{1,0:T(1,128)}', space=vmem, size = 0x9000, scoped, tag = 'internal scratch']
  %s0 = inlined_call_operand.vmem [shape: f32[16,32], index: 0, kind: input, shape index: {}]
  %s1 = inlined_call_operand.vmem [shape: f32[32,256], index: 1, kind: input, shape index: {}]
  %s2 = inlined_call_operand.vmem [shape: f32[128,32], index: 2, kind: input, shape index: {}]
  %s3 = inlined_call_operand.hbm [shape: f32[16,32], index: 3, kind: output, shape index: {}]
  %s4 = sld [smem:[#allocation0]]
  $region22: #{tpu_custom_call.1} parent=0
    _
  %s6 = ssub.s32 1, %s4
  %s7 = scalar_select 0, %s6, %s4
  $region1: #{tpu_custom_call.1} parent=0
    #allocation2 [shape = 'u8[8192]{0}', space=vmem, size = 0x2000, scoped, tag = 'output window, operand 0, single buffered']
    #allocation3 [shape = 's32[1]{0}', space=sflag, size = 0x4, scoped, tag = 'scoped memory for tpu_custom_call.1']
    %8 = vsyncpa [#allocation3], 0
    // Predicated region
    $region2: #{tpu_custom_call.1} parent=1 // pred_check
      _
    $region3: #{tpu_custom_call.1} parent=1 // pred_check_branch
      %10 = sbr.rel (0) target = $region5
    $region4: #{tpu_custom_call.1} parent=1 // pred_region
      _
    $region5: #{tpu_custom_call.1} parent=1 // pred_fallthru
      _
    // Predicated region
    $region6: #{tpu_custom_call.1} parent=1 // pred_check
      _
    $region7: #{tpu_custom_call.1} parent=1 // pred_check_branch
      %12 = sbr.rel (0) target = $region9
    $region8: #{tpu_custom_call.1} parent=1 // pred_region
      _
    $region9: #{tpu_custom_call.1} parent=1 // pred_fallthru
      _
    // Predicated region
    $region10: #{tpu_custom_call.1} parent=1 // pred_check
      _
    $region11: #{tpu_custom_call.1} parent=1 // pred_check_branch
      %14 = sbr.rel (0) target = $region13
    $region12: #{tpu_custom_call.1} parent=1 // pred_region
      _
    $region13: #{tpu_custom_call.1} parent=1 // pred_fallthru
      _
    %v15 = vld [vmem:[%s0] sm:$0xff]
    %v16 = vld [vmem:[%s0 + $0x8] sm:$0xff]
    %v17 = vld [vmem:[%s1] sm:$0xff]
    %v18 = vld [vmem:[%s1 + $0x8] sm:$0xff]
    %v19 = vld [vmem:[%s1 + $0x10] sm:$0xff]
    %v20 = vld [vmem:[%s1 + $0x18] sm:$0xff]
    %v21 = vld [vmem:[%s1 + $0x20] sm:$0xff]
    %v22 = vld [vmem:[%s1 + $0x28] sm:$0xff]
    %v23 = vld [vmem:[%s1 + $0x30] sm:$0xff]
    %v24 = vld [vmem:[%s1 + $0x38] sm:$0xff]
    %vm25 = vcmask 261120
    %v27 = vsel %vm25, %v15, 0
    %v30 = vsel %vm25, %v16, 0
    %32 = vmatpush.msra.mxu0 0.0
    %33 = vmatpush.msra.mxu0 0.0
    %34 = vmatpush.msra.mxu0 0.0
    %35 = vmatpush.msra.mxu0 0.0
    %36 = vmatpush.msra.mxu0 0.0
    %37 = vmatpush.msra.mxu0 0.0
    %38 = vmatpush.msra.mxu0 0.0
    %39 = vmatpush.msra.mxu0 0.0
    %40 = vmatpush.msra.mxu0 0.0
    %41 = vmatpush.msra.mxu0 0.0
    %42 = vmatpush.msra.mxu0 0.0
    %43 = vmatpush.msra.mxu0 0.0
    %44 = vmatpush.msra.mxu0 %v23
    %45 = vmatpush.msra.mxu0 %v21
    %46 = vmatpush.msra.mxu0 %v19
    %47 = vmatpush.msra.mxu0 %v17
    %48 = vmatmul.f32.gmra.mxu0 %v27
    %v49 = vpop.f32.mrf.mxu0
    %v50 = vadd.f32 0.0, %v49
    %51 = vmatmul.f32.gmra.mxu0 %v30
    %v52 = vpop.f32.mrf.mxu0
    %v53 = vadd.f32 0.0, %v52
    %54 = vdwg.mxu0
    %55 = vmatpush.msra.mxu0 0.0
    %56 = vmatpush.msra.mxu0 0.0
    %57 = vmatpush.msra.mxu0 0.0
    %58 = vmatpush.msra.mxu0 0.0
    %59 = vmatpush.msra.mxu0 0.0
    %60 = vmatpush.msra.mxu0 0.0
    %61 = vmatpush.msra.mxu0 0.0
    %62 = vmatpush.msra.mxu0 0.0
    %63 = vmatpush.msra.mxu0 0.0
    %64 = vmatpush.msra.mxu0 0.0
    %65 = vmatpush.msra.mxu0 0.0
    %66 = vmatpush.msra.mxu0 0.0
    %67 = vmatpush.msra.mxu0 %v24
    %68 = vmatpush.msra.mxu0 %v22
    %69 = vmatpush.msra.mxu0 %v20
    %70 = vmatpush.msra.mxu0 %v18
    %71 = vmatmul.f32.gmra.mxu0 %v27
    %v72 = vpop.f32.mrf.mxu0
    %v73 = vadd.f32 0.0, %v72
    %74 = vmatmul.f32.gmra.mxu0 %v30
    %v75 = vpop.f32.mrf.mxu0
    %v76 = vadd.f32 0.0, %v75
    %77 = vdwg.mxu0
    %v78 = vsub.f32 0.0, %v50
    %v79 = vsub.f32 0.0, %v53
    %v80 = vmul.f32 %v78, 1.442695
    %v81 = vpow.pop %v80
    %v82 = vmul.f32 %v79, 1.442695
    %v83 = vpow.pop %v82
    %v84 = vadd.f32 %v81, 1.0
    %v85 = vadd.f32 %v83, 1.0
    %v86 = vrcp.pop %v84
    %v87 = vrcp.pop %v85
    %v88 = vmul.f32 %v50, %v86
    %v89 = vmul.f32 %v53, %v87
    %v90 = vmul.f32 %v88, %v73
    %v91 = vmul.f32 %v89, %v76
    %v92 = vld [vmem:[%s2] sm:$0xff]
    %v93 = vld [vmem:[%s2 + $0x8] sm:$0xff]
    %v94 = vld [vmem:[%s2 + $0x10] sm:$0xff]
    %v95 = vld [vmem:[%s2 + $0x18] sm:$0xff]
    %v96 = vld [vmem:[%s2 + $0x20] sm:$0xff]
    %v97 = vld [vmem:[%s2 + $0x28] sm:$0xff]
    %v98 = vld [vmem:[%s2 + $0x30] sm:$0xff]
    %v99 = vld [vmem:[%s2 + $0x38] sm:$0xff]
    %v100 = vld [vmem:[%s2 + $0x40] sm:$0xff]
    %v101 = vld [vmem:[%s2 + $0x48] sm:$0xff]
    %v102 = vld [vmem:[%s2 + $0x50] sm:$0xff]
    %v103 = vld [vmem:[%s2 + $0x58] sm:$0xff]
    %v104 = vld [vmem:[%s2 + $0x60] sm:$0xff]
    %v105 = vld [vmem:[%s2 + $0x68] sm:$0xff]
    %v106 = vld [vmem:[%s2 + $0x70] sm:$0xff]
    %v107 = vld [vmem:[%s2 + $0x78] sm:$0xff]
    %108 = vmatpush.msra.mxu0 %v107
    %109 = vmatpush.msra.mxu0 %v106
    %110 = vmatpush.msra.mxu0 %v105
    %111 = vmatpush.msra.mxu0 %v104
    %112 = vmatpush.msra.mxu0 %v103
    %113 = vmatpush.msra.mxu0 %v102
    %114 = vmatpush.msra.mxu0 %v101
    %115 = vmatpush.msra.mxu0 %v100
    %116 = vmatpush.msra.mxu0 %v99
    %117 = vmatpush.msra.mxu0 %v98
    %118 = vmatpush.msra.mxu0 %v97
    %119 = vmatpush.msra.mxu0 %v96
    %120 = vmatpush.msra.mxu0 %v95
    %121 = vmatpush.msra.mxu0 %v94
    %122 = vmatpush.msra.mxu0 %v93
    %123 = vmatpush.msra.mxu0 %v92
    %124 = vmatmul.f32.gmra.mxu0 %v90
    %v125 = vpop.f32.mrf.mxu0
    %v126 = vadd.f32 0.0, %v125
    %127 = vmatmul.f32.gmra.mxu0 %v91
    %v128 = vpop.f32.mrf.mxu0
    %v129 = vadd.f32 0.0, %v128
    %130 = vdwg.mxu0
    %131 = vst.msk [vmem:[#allocation2] sm:$0xff] %vm25, %v126
    %132 = vst.msk [vmem:[#allocation2 + $0x8] sm:$0xff] %vm25, %v129
    // Predicated region
    $region14: #{tpu_custom_call.1} parent=1 // pred_check
      _
    $region15: #{tpu_custom_call.1} parent=1 // pred_check_branch
      %134 = sbr.rel (0) target = $region17
    $region16: #{tpu_custom_call.1} parent=1 // pred_region
      %136 = vsyncadd [#allocation3], 0
      %s137 = sshll.u32 [#allocation2], 4
      %s138 = int_to_ptr.vmem [resolvable:$true] %s137
      %s139 = sshll.u32 %s3, 4
      %s140 = int_to_ptr.hbm [resolvable:$true] %s139
      %145 = dma.vmem_to_hbm [thread:$0]  %s138, 256, %s140, [#allocation3], 128, 128, 8
    $region17: #{tpu_custom_call.1} parent=1 // pred_fallthru
      _
    // Predicated region
    $region18: #{tpu_custom_call.1} parent=1 // pred_check
      _
    $region19: #{tpu_custom_call.1} parent=1 // pred_check_branch
      %147 = sbr.rel (0) target = $region21
    $region20: #{tpu_custom_call.1} parent=1 // pred_region
      %149 = dma.done [#allocation3], 256
    $region21: #{tpu_custom_call.1} parent=1 // pred_fallthru
      _
    %150 = vsyncpa [#allocation3], 1

</llo_original>
